<compile_context>
chip_gen: v7x
topology: tpu7x:2x2x1
jax: 0.10.0
libtpu: 0.0.40
codegen_flags: <defaults>
</compile_context>

<pallas_src>
import math
from functools import partial

import jax
import jax.numpy as jnp
from jax.experimental import pallas as pl
from jax.experimental.pallas import tpu as pltpu


def _make_pe(d_model: int, max_len: int = 5000) -> jnp.ndarray:
    """Deterministic sinusoidal PE table, identical to the torch __init__."""
    assert d_model % 2 == 0, "PositionalEncoding requires an even d_model"
    position = jnp.arange(max_len, dtype=jnp.float32)[:, None]              # (L, 1)
    div_term = jnp.exp(
        jnp.arange(0, d_model, 2, dtype=jnp.float32) * (-math.log(10000.0) / d_model)
    )                                                                       # (D/2,)
    angles = position * div_term                                            # (L, D/2)
    # interleave: pe[:, 0::2] = sin, pe[:, 1::2] = cos
    pe = jnp.stack([jnp.sin(angles), jnp.cos(angles)], axis=-1)             # (L, D/2, 2)
    return pe.reshape(max_len, d_model)                                     # (L, D)


def _add_pe_kernel(x_ref, pe_ref, o_ref):
    # x_ref: (B, tN) tile; pe_ref: (1, tN) tile broadcast over the batch rows.
    o_ref[...] = x_ref[...] + pe_ref[...]


def _choose_tile_n(n: int, max_tn: int) -> int:
    """Largest lane-dense (multiple-of-128) tile <= max_tn that divides n."""
    if n <= max_tn:
        return n
    tn = (max_tn // 128) * 128
    while tn >= 128:
        if n % tn == 0:
            return tn
        tn -= 128
    # Fallback: no clean lane-dense divisor — take the full row (rare shapes).
    return n


# Conservative scoped-VMEM limit that is safe on v7x (64 MiB physical) while
# still allowing large tiles; v5e/v6e (128 MiB physical) have ample headroom.
_VMEM_LIMIT_BYTES = 48 * 1024 * 1024


@partial(jax.jit, static_argnames=())
def positional_encoding_forward(x: jnp.ndarray, pe_table: jnp.ndarray) -> jnp.ndarray:
    """x: (B, S, D); pe_table: (max_len, D). Returns x + pe[None, :S, :]."""
    B, S, D = x.shape
    N = S * D

    # Glue/layout plumbing (no compute): slice, match dtype, flatten to lane-dense.
    pe2 = pe_table[:S, :].astype(x.dtype).reshape(1, N)   # same PE for every batch row
    x2 = x.reshape(B, N)

    # Size the tile so the pipelined working set fits comfortably:
    #   2 x-in bufs (B, tN) + 2 out bufs (B, tN) + 2 pe bufs (1, tN).
    itemsize = jnp.dtype(x.dtype).itemsize
    budget = int(_VMEM_LIMIT_BYTES * 0.6)
    max_tn = max(budget // (itemsize * (4 * B + 2)), 1)
    tn = _choose_tile_n(N, max_tn)
    grid = (N // tn,)

    out2 = pl.pallas_call(
        _add_pe_kernel,
        out_shape=jax.ShapeDtypeStruct((B, N), x.dtype),
        grid=grid,
        in_specs=[
            pl.BlockSpec((B, tn), lambda n: (0, n)),   # x tile (full batch, lane-dense)
            pl.BlockSpec((1, tn), lambda n: (0, n)),   # PE tile, broadcast in-kernel
        ],
        out_specs=pl.BlockSpec((B, tn), lambda n: (0, n)),
        input_output_aliases={0: 0},                   # in-place-style add: alias x -> out
        compiler_params=pltpu.CompilerParams(
            dimension_semantics=("parallel",),
            vmem_limit_bytes=_VMEM_LIMIT_BYTES,
        ),
    )(x2, pe2)

    return out2.reshape(B, S, D)


if __name__ == "__main__":
    B, S, D = 2, 8, 32
    MAX_LEN = 5000

    key = jax.random.PRNGKey(0)
    x = jax.random.normal(key, (B, S, D), dtype=jnp.float32)

    pe_table = _make_pe(D, MAX_LEN)

    # Reference of the torch forward (computed before the aliased kernel call).
    ref = x + pe_table[None, :S, :]

    out = jax.block_until_ready(positional_encoding_forward(x, pe_table))

    assert out.shape == (B, S, D)
    assert jnp.allclose(out, ref, atol=1e-6), "mismatch vs reference"

    print("KERNEL_OK")
</pallas_src>

<mosaic_0001>
module attributes {stable_mosaic.version = 11 : i64} {
  func.func @_add_pe_kernel(%arg0: i32, %arg1: memref<2x256xf32, #tpu.memory_space<vmem>>, %arg2: memref<1x256xf32, #tpu.memory_space<vmem>>, %arg3: memref<2x256xf32, #tpu.memory_space<vmem>>) attributes {dimension_semantics = [#tpu.dimension_semantics<parallel>], iteration_bounds = array<i64: 1>, scalar_prefetch = 0 : i64, scratch_operands = 0 : i64, tpu.core_type = #tpu.core_type<tc>, window_params = [{transform_indices = @transform_0, window_bounds = array<i64: 2, 256>}, {transform_indices = @transform_1, window_bounds = array<i64: 1, 256>}, {transform_indices = @transform_2, window_bounds = array<i64: 2, 256>}]} {
    %c0 = arith.constant 0 : index
    %c0_0 = arith.constant 0 : index
    %0 = vector.load %arg1[%c0, %c0_0] : memref<2x256xf32, #tpu.memory_space<vmem>>, vector<2x256xf32>
    %c0_1 = arith.constant 0 : index
    %c0_2 = arith.constant 0 : index
    %1 = vector.load %arg2[%c0_1, %c0_2] : memref<1x256xf32, #tpu.memory_space<vmem>>, vector<1x256xf32>
    %2 = vector.broadcast %1 : vector<1x256xf32> to vector<2x256xf32>
    %3 = arith.addf %0, %2 : vector<2x256xf32>
    %c0_3 = arith.constant 0 : index
    %c0_4 = arith.constant 0 : index
    %4 = vector.load %arg3[%c0_3, %c0_4] : memref<2x256xf32, #tpu.memory_space<vmem>>, vector<2x256xf32>
    tpu.vector_store %arg3[%c0_3, %c0_4], %3 {strides = array<i32>} : memref<2x256xf32, #tpu.memory_space<vmem>>, vector<2x256xf32>,
    return
  }
  func.func @transform_0(%arg0: i32) -> (i32, i32) {
    %c0_i32 = arith.constant 0 : i32
    %c0_i32_0 = arith.constant 0 : i32
    return %c0_i32, %arg0 : i32, i32
  }
  func.func @transform_1(%arg0: i32) -> (i32, i32) {
    %c0_i32 = arith.constant 0 : i32
    %c0_i32_0 = arith.constant 0 : i32
    return %c0_i32, %arg0 : i32, i32
  }
  func.func @transform_2(%arg0: i32) -> (i32, i32) {
    %c0_i32 = arith.constant 0 : i32
    %c0_i32_0 = arith.constant 0 : i32
    return %c0_i32, %arg0 : i32, i32
  }
}

</mosaic_0001>

<llo_original>
// kernel: positional_encoding_forward.1
$region0: #{positional_encoding_forward.1}
  #allocation0 [shape = 'u32[]', space=smem, size = 0x4, offset = 0x4, fixed_abs, tag = 'smem constant byte address 0x4 - core index']
  #allocation1 [shape = 'u32[144,128]{1,0:T(1,128)}', space=vmem, size = 0x12000, scoped, tag = 'internal scratch']
  %s0 = inlined_call_operand.vmem [shape: f32[2,256], index: 0, kind: input, shape index: {}, may-alias: {0,2}]
  %s1 = inlined_call_operand.vmem [shape: f32[1,256], index: 1, kind: input, shape index: {}]
  %s2 = inlined_call_operand.vmem [shape: f32[2,256], index: 2, kind: output, shape index: {}, may-alias: {0,2}]
  %s3 = sld [smem:[#allocation0]]
  $region18: #{positional_encoding_forward.1} parent=0
    _
  %s5 = ssub.s32 1, %s3
  %s6 = scalar_select 0, %s5, %s3
  // Predicated region
  $region2: #{positional_encoding_forward.1} parent=0 // pred_check
    _
  $region3: #{positional_encoding_forward.1} parent=0 // pred_check_branch
    %8 = sbr.rel (0) target = $region5
  $region4: #{positional_encoding_forward.1} parent=0 // pred_region
    _
  $region5: #{positional_encoding_forward.1} parent=0 // pred_fallthru
    _
  // Predicated region
  $region6: #{positional_encoding_forward.1} parent=0 // pred_check
    _
  $region7: #{positional_encoding_forward.1} parent=0 // pred_check_branch
    %10 = sbr.rel (0) target = $region9
  $region8: #{positional_encoding_forward.1} parent=0 // pred_region
    _
  $region9: #{positional_encoding_forward.1} parent=0 // pred_fallthru
    _
  %v11 = vld [vmem:[%s0] sm:$0xf]
  %v12 = vld [vmem:[%s1] sm:$0x3]
  %v14 = vlaneseq
  %v15 = vshrl.u32 %v14, 7
  %v16 = vsub.s32 0, %v15
  %v17 = vrot.slane %v12, %v16
  %v18 = vlaneseq
  %v19 = vshrl.u32 %v18, 7
  %v20 = vsub.s32 1, %v19
  %v21 = vrot.slane %v12, %v20
  %v22 = vcombine.low %v17, %v21
  %v24 = vunpack.c.l.s4 1983009808
  %v25 = vunpack.c.0.s8 %v24
  %v26 = vlaneseq
  %v27 = vshrl.u32 %v26, 7
  %v28 = vsub.s32 %v25, %v27
  %v29 = vrot.slane %v22, %v28
  %v31 = vadd.f32 %v11, %v29
  %32 = vst [vmem:[%s2] sm:$0xf] %v31
  // Predicated region
  $region10: #{positional_encoding_forward.1} parent=0 // pred_check
    _
  $region11: #{positional_encoding_forward.1} parent=0 // pred_check_branch
    %34 = sbr.rel (0) target = $region13
  $region12: #{positional_encoding_forward.1} parent=0 // pred_region
    _
  $region13: #{positional_encoding_forward.1} parent=0 // pred_fallthru
    _
  // Predicated region
  $region14: #{positional_encoding_forward.1} parent=0 // pred_check
    _
  $region15: #{positional_encoding_forward.1} parent=0 // pred_check_branch
    %36 = sbr.rel (0) target = $region17
  $region16: #{positional_encoding_forward.1} parent=0 // pred_region
    _
  $region17: #{positional_encoding_forward.1} parent=0 // pred_fallthru
    _

</llo_original>
